<compile_context>
chip_gen: v6e
topology: v6e:2x2x1
jax: 0.10.0
libtpu: 0.0.40
codegen_flags: <defaults>
</compile_context>

<pallas_src>
from functools import partial

import jax
import jax.numpy as jnp
from jax.experimental import pallas as pl
from jax.experimental.pallas import tpu as pltpu

EPS = 1e-5  # nn.LayerNorm default eps


# -----------------------------------------------------------------------------
# Helpers (all math in f32)
# -----------------------------------------------------------------------------
def _layernorm(x, gamma, beta):
    mu = jnp.mean(x, axis=-1, keepdims=True)
    var = jnp.mean((x - mu) ** 2, axis=-1, keepdims=True)
    return (x - mu) * jax.lax.rsqrt(var + EPS) * gamma + beta


def _gelu_exact(x):
    # PyTorch nn.GELU default (erf-based, exact)
    return 0.5 * x * (1.0 + jax.lax.erf(x * (1.0 / jnp.sqrt(2.0))))


# -----------------------------------------------------------------------------
# Kernels
# -----------------------------------------------------------------------------
def _patch_embed_kernel(p_ref, w_ref, b_ref, pos_ref, o_ref):
    # p_ref: (tm, P) bf16   w_ref: (P, E) bf16   b_ref: (1, E) f32
    # pos_ref: (tm, E) f32  o_ref: (tm, E) bf16
    acc = jnp.dot(p_ref[...], w_ref[...], preferred_element_type=jnp.float32)
    o_ref[...] = (acc + b_ref[...] + pos_ref[...]).astype(o_ref.dtype)


def _blocks_kernel(x_ref, ln1g_ref, ln1b_ref, wqkv_ref, wproj_ref, bproj_ref,
                   ln2g_ref, ln2b_ref, w1_ref, b1_ref, w2_ref, b2_ref,
                   o_ref, *, num_heads, scale):
    # grid = (B, depth); the output block (1, N, C) has a constant index across
    # the depth axis, so it stays resident in VMEM and carries the token state
    # from block d-1 to block d without touching HBM.
    d = pl.program_id(1)

    @pl.when(d == 0)
    def _():
        o_ref[...] = x_ref[...].astype(o_ref.dtype)

    x = o_ref[0]                       # (N, C) f32 resident state
    C = x.shape[-1]
    hd = C // num_heads

    # --- MHSA branch -------------------------------------------------------
    xn = _layernorm(x, ln1g_ref[0], ln1b_ref[0]).astype(jnp.bfloat16)
    qkv = jnp.dot(xn, wqkv_ref[0], preferred_element_type=jnp.float32)  # (N, 3C)

    ctx_cols = []
    for h in range(num_heads):         # static unrolled loop over heads
        q = qkv[:, h * hd:(h + 1) * hd].astype(jnp.bfloat16)
        k = qkv[:, C + h * hd:C + (h + 1) * hd].astype(jnp.bfloat16)
        v = qkv[:, 2 * C + h * hd:2 * C + (h + 1) * hd].astype(jnp.bfloat16)
        a = jnp.dot(q, k.T, preferred_element_type=jnp.float32) * scale   # (N, N)
        a = a - jnp.max(a, axis=-1, keepdims=True)
        e = jnp.exp(a)
        p = e * pl.reciprocal(jnp.sum(e, axis=-1, keepdims=True), approx=True)
        ctx_cols.append(jnp.dot(p.astype(jnp.bfloat16), v,
                                preferred_element_type=jnp.float32))      # (N, hd)
    # fused output projection: one (N, C) @ (C, C) matmul (full-K MXU pass)
    ctx = jnp.concatenate(ctx_cols, axis=-1).astype(jnp.bfloat16)         # (N, C)
    attn_out = jnp.dot(ctx, wproj_ref[0],
                       preferred_element_type=jnp.float32) + bproj_ref[0]
    x1 = x + attn_out                  # residual 1 (f32)

    # --- MLP branch ---------------------------------------------------------
    x2n = _layernorm(x1, ln2g_ref[0], ln2b_ref[0]).astype(jnp.bfloat16)
    h1 = jnp.dot(x2n, w1_ref[0], preferred_element_type=jnp.float32) + b1_ref[0]
    h1 = _gelu_exact(h1).astype(jnp.bfloat16)
    mlp_out = jnp.dot(h1, w2_ref[0], preferred_element_type=jnp.float32) + b2_ref[0]

    o_ref[0] = (x1 + mlp_out).astype(o_ref.dtype)   # residual 2, carried state


def _head_kernel(x_ref, g_ref, b_ref, wh_ref, bh_ref, o_ref):
    # x_ref: (B, C) f32 -> LayerNorm + classifier head (lane-padded output)
    xn = _layernorm(x_ref[...], g_ref[...], b_ref[...]).astype(jnp.bfloat16)
    o_ref[...] = (jnp.dot(xn, wh_ref[...], preferred_element_type=jnp.float32)
                  + bh_ref[...])


# -----------------------------------------------------------------------------
# Wrappers
# -----------------------------------------------------------------------------
def patch_embed_call(patches, w_t, bias, pos, *, tm=256):
    M, P = patches.shape
    E = w_t.shape[1]
    tm = min(tm, M)
    return pl.pallas_call(
        _patch_embed_kernel,
        out_shape=jax.ShapeDtypeStruct((M, E), jnp.bfloat16),
        grid=(pl.cdiv(M, tm),),
        in_specs=[
            pl.BlockSpec((tm, P), lambda i: (i, 0)),
            pl.BlockSpec((P, E), lambda i: (0, 0)),
            pl.BlockSpec((1, E), lambda i: (0, 0)),
            pl.BlockSpec((tm, E), lambda i: (i, 0)),
        ],
        out_specs=pl.BlockSpec((tm, E), lambda i: (i, 0)),
        compiler_params=pltpu.CompilerParams(dimension_semantics=("parallel",)),
    )(patches, w_t, bias, pos)


def transformer_blocks_call(x, sp, *, num_heads, depth):
    """Runs ALL transformer blocks in one pallas_call; weights stacked on depth."""
    B, N, C = x.shape
    hidden = sp["w1_t"].shape[-1]
    scale = (C // num_heads) ** -0.5
    kernel = partial(_blocks_kernel, num_heads=num_heads, scale=scale)

    def wspec(shape):
        # per-block weight slab, selected by the depth grid axis
        return pl.BlockSpec((1,) + shape, lambda b, d: (d, 0, 0))

    return pl.pallas_call(
        kernel,
        out_shape=jax.ShapeDtypeStruct((B, N, C), jnp.float32),
        grid=(B, depth),
        in_specs=[
            pl.BlockSpec((1, N, C), lambda b, d: (b, 0, 0)),   # x (per-batch tile)
            wspec((1, C)), wspec((1, C)),                      # ln1 gamma/beta
            wspec((C, 3 * C)),                                 # Wqkv^T
            wspec((C, C)), wspec((1, C)),                      # Wproj^T, bproj
            wspec((1, C)), wspec((1, C)),                      # ln2 gamma/beta
            wspec((C, hidden)), wspec((1, hidden)),            # W1^T, b1
            wspec((hidden, C)), wspec((1, C)),                 # W2^T, b2
        ],
        out_specs=pl.BlockSpec((1, N, C), lambda b, d: (b, 0, 0)),
        compiler_params=pltpu.CompilerParams(
            dimension_semantics=("parallel", "arbitrary"),
            vmem_limit_bytes=48 * 1024 * 1024),
    )(x, sp["ln1_g"], sp["ln1_b"], sp["wqkv_t"], sp["wproj_t"], sp["bproj"],
      sp["ln2_g"], sp["ln2_b"], sp["w1_t"], sp["b1"], sp["w2_t"], sp["b2"])


def head_call(x_cls, g, b, wh_t, bh, num_classes):
    B = x_cls.shape[0]
    ncp = wh_t.shape[1]   # lane-padded (multiple of 128)
    out = pl.pallas_call(
        _head_kernel,
        out_shape=jax.ShapeDtypeStruct((B, ncp), jnp.float32),
    )(x_cls, g, b, wh_t, bh)
    return out[:, :num_classes]


def vit_dtn_forward(x, params, cfg):
    B, Cin, H, W = x.shape
    ph = pw = cfg["patch_size"]
    E = cfg["embed_dim"]
    nH, nW = H // ph, W // pw
    nP = nH * nW

    # ---- PatchEmbed: Conv2d(k=stride=patch) == patch-flatten + matmul -------
    patches = (
        x.reshape(B, Cin, nH, ph, nW, pw)
        .transpose(0, 2, 4, 1, 3, 5)                      # (B, nH, nW, C, ph, pw)
        .reshape(B * nP, Cin * ph * pw)
    ).astype(jnp.bfloat16)
    pos = jnp.broadcast_to(params["pos_embed"], (B, nP, E)).reshape(B * nP, E)
    tok = patch_embed_call(patches, params["conv_w_t"], params["conv_b"], pos)
    tok = tok.reshape(B, nP, E)

    # ---- prepend cls token (local_up_to_layer == 0) --------------------------
    cls = jnp.broadcast_to(params["cls_token"], (B, 1, E)).astype(tok.dtype)
    tok = jnp.concatenate([cls, tok], axis=1)             # (B, nP+1, E) bf16

    # ---- all transformer blocks in one fused pallas_call ---------------------
    tok = transformer_blocks_call(tok, params["stack"],
                                  num_heads=cfg["num_heads"], depth=cfg["depth"])

    # ---- final LayerNorm + classifier head on cls token ----------------------
    return head_call(tok[:, 0, :], params["norm_g"], params["norm_b"],
                     params["head_w_t"], params["head_b"], cfg["num_classes"])


# -----------------------------------------------------------------------------
# Deterministic parameter init (synthetic; mirrors module shapes)
# -----------------------------------------------------------------------------
def trunc_normal(key, shape, std=0.02):
    return jax.random.truncated_normal(key, -2.0, 2.0, shape, jnp.float32) * std


def init_params(key, cfg):
    Cin, ph, E = cfg["in_chans"], cfg["patch_size"], cfg["embed_dim"]
    hidden = int(E * cfg["mlp_ratio"])
    nP = (cfg["img_size"] // ph) ** 2
    nc = cfg["num_classes"]
    nc_pad = ((nc + 127) // 128) * 128          # lane-dense classifier output
    depth = cfg["depth"]

    keys = iter(jax.random.split(key, 5 + 4 * depth))

    head_w = trunc_normal(next(keys), (nc, E))  # PyTorch Linear weight (out, in)
    head_w_t = jnp.zeros((E, nc_pad), jnp.float32).at[:, :nc].set(head_w.T)

    params = {
        "conv_w_t": trunc_normal(next(keys), (E, Cin * ph * ph)).T.astype(jnp.bfloat16),
        "conv_b": trunc_normal(next(keys), (1, E)),
        "pos_embed": trunc_normal(next(keys), (1, nP, E)),
        "cls_token": trunc_normal(next(keys), (1, 1, E)).astype(jnp.bfloat16),
        "norm_g": jnp.ones((1, E), jnp.float32),
        "norm_b": jnp.zeros((1, E), jnp.float32),
        "head_w_t": head_w_t.astype(jnp.bfloat16),
        "head_b": jnp.zeros((1, nc_pad), jnp.float32),
    }

    wqkv_l, wproj_l, w1_l, w2_l = [], [], [], []
    for _ in range(depth):
        wqkv_l.append(trunc_normal(next(keys), (3 * E, E)).T)   # (E, 3E), no bias
        wproj_l.append(trunc_normal(next(keys), (E, E)).T)      # (E, E)
        w1_l.append(trunc_normal(next(keys), (hidden, E)).T)    # (E, hidden)
        w2_l.append(trunc_normal(next(keys), (E, hidden)).T)    # (hidden, E)

    params["stack"] = {
        "ln1_g": jnp.ones((depth, 1, E), jnp.float32),
        "ln1_b": jnp.zeros((depth, 1, E), jnp.float32),
        "wqkv_t": jnp.stack(wqkv_l).astype(jnp.bfloat16),       # (depth, E, 3E)
        "wproj_t": jnp.stack(wproj_l).astype(jnp.bfloat16),     # (depth, E, E)
        "bproj": jnp.zeros((depth, 1, E), jnp.float32),
        "ln2_g": jnp.ones((depth, 1, E), jnp.float32),
        "ln2_b": jnp.zeros((depth, 1, E), jnp.float32),
        "w1_t": jnp.stack(w1_l).astype(jnp.bfloat16),           # (depth, E, hidden)
        "b1": jnp.zeros((depth, 1, hidden), jnp.float32),
        "w2_t": jnp.stack(w2_l).astype(jnp.bfloat16),           # (depth, hidden, E)
        "b2": jnp.zeros((depth, 1, E), jnp.float32),
    }
    return params


# -----------------------------------------------------------------------------
if __name__ == "__main__":
    cfg = dict(
        img_size=16,
        patch_size=8,
        in_chans=4,
        embed_dim=32,
        depth=2,
        num_heads=4,
        mlp_ratio=4.0,
        num_classes=10,
        local_up_to_layer=0,
    )
    key = jax.random.PRNGKey(0)
    kx, kp = jax.random.split(key)

    params = init_params(kp, cfg)
    x = jax.random.normal(kx, (2, cfg["in_chans"], cfg["img_size"], cfg["img_size"]),
                          jnp.float32)

    out = vit_dtn_forward(x, params, cfg)
    out = jax.block_until_ready(out)
    assert out.shape == (2, cfg["num_classes"]) and out.dtype == jnp.float32
    print("KERNEL_OK")
</pallas_src>

<mosaic_0001>
module attributes {stable_mosaic.version = 11 : i64} {
  func.func @_patch_embed_kernel(%arg0: i32, %arg1: memref<8x256xbf16, #tpu.memory_space<vmem>>, %arg2: memref<256x32xbf16, #tpu.memory_space<vmem>>, %arg3: memref<1x32xf32, #tpu.memory_space<vmem>>, %arg4: memref<8x32xf32, #tpu.memory_space<vmem>>, %arg5: memref<8x32xbf16, #tpu.memory_space<vmem>>) attributes {dimension_semantics = [#tpu.dimension_semantics<parallel>], iteration_bounds = array<i64: 1>, scalar_prefetch = 0 : i64, scratch_operands = 0 : i64, tpu.core_type = #tpu.core_type<tc>, window_params = [{transform_indices = @transform_0, window_bounds = array<i64: 8, 256>}, {pipeline_mode = #tpu.pipeline_mode<synchronous>, transform_indices = @transform_1, window_bounds = array<i64: 256, 32>}, {pipeline_mode = #tpu.pipeline_mode<synchronous>, transform_indices = @transform_2, window_bounds = array<i64: 1, 32>}, {transform_indices = @transform_3, window_bounds = array<i64: 8, 32>}, {transform_indices = @transform_4, window_bounds = array<i64: 8, 32>}]} {
    %c0 = arith.constant 0 : index
    %c0_0 = arith.constant 0 : index
    %0 = vector.load %arg1[%c0, %c0_0] : memref<8x256xbf16, #tpu.memory_space<vmem>>, vector<8x256xbf16>
    %c0_1 = arith.constant 0 : index
    %c0_2 = arith.constant 0 : index
    %1 = vector.load %arg2[%c0_1, %c0_2] : memref<256x32xbf16, #tpu.memory_space<vmem>>, vector<256x32xbf16>
    %cst = arith.constant dense<0.000000e+00> : vector<8x32xf32>
    %2 = tpu.matmul %0, %1, %cst {dimension_numbers = #tpu.dot_dimension_numbers<[1], [0], [0], [1], [0, 0, 1, 1], [], []>} : vector<8x256xbf16>, vector<256x32xbf16>, vector<8x32xf32> -> vector<8x32xf32>
    %c0_3 = arith.constant 0 : index
    %c0_4 = arith.constant 0 : index
    %3 = vector.load %arg3[%c0_3, %c0_4] : memref<1x32xf32, #tpu.memory_space<vmem>>, vector<1x32xf32>
    %4 = vector.broadcast %3 : vector<1x32xf32> to vector<8x32xf32>
    %5 = arith.addf %2, %4 : vector<8x32xf32>
    %c0_5 = arith.constant 0 : index
    %c0_6 = arith.constant 0 : index
    %6 = vector.load %arg4[%c0_5, %c0_6] : memref<8x32xf32, #tpu.memory_space<vmem>>, vector<8x32xf32>
    %7 = arith.addf %5, %6 : vector<8x32xf32>
    %8 = arith.truncf %7 : vector<8x32xf32> to vector<8x32xbf16>
    %c0_7 = arith.constant 0 : index
    %c0_8 = arith.constant 0 : index
    %9 = vector.load %arg5[%c0_7, %c0_8] : memref<8x32xbf16, #tpu.memory_space<vmem>>, vector<8x32xbf16>
    tpu.vector_store %arg5[%c0_7, %c0_8], %8 {strides = array<i32>} : memref<8x32xbf16, #tpu.memory_space<vmem>>, vector<8x32xbf16>,
    return
  }
  func.func @transform_0(%arg0: i32) -> (i32, i32) {
    %c0_i32 = arith.constant 0 : i32
    %c0_i32_0 = arith.constant 0 : i32
    return %arg0, %c0_i32 : i32, i32
  }
  func.func @transform_1(%arg0: i32) -> (i32, i32) {
    %c0_i32 = arith.constant 0 : i32
    %c0_i32_0 = arith.constant 0 : i32
    %c0_i32_1 = arith.constant 0 : i32
    return %c0_i32, %c0_i32_0 : i32, i32
  }
  func.func @transform_2(%arg0: i32) -> (i32, i32) {
    %c0_i32 = arith.constant 0 : i32
    %c0_i32_0 = arith.constant 0 : i32
    %c0_i32_1 = arith.constant 0 : i32
    return %c0_i32, %c0_i32_0 : i32, i32
  }
  func.func @transform_3(%arg0: i32) -> (i32, i32) {
    %c0_i32 = arith.constant 0 : i32
    %c0_i32_0 = arith.constant 0 : i32
    return %arg0, %c0_i32 : i32, i32
  }
  func.func @transform_4(%arg0: i32) -> (i32, i32) {
    %c0_i32 = arith.constant 0 : i32
    %c0_i32_0 = arith.constant 0 : i32
    return %arg0, %c0_i32 : i32, i32
  }
}

</mosaic_0001>

<llo_original>
// kernel: tpu_custom_call.1
$region0: #{tpu_custom_call.1}
  #allocation0 [shape = 'u32[]', space=smem, size = 0x4, offset = 0x4, fixed_abs, tag = 'smem constant byte address 0x4 - core index']
  #allocation1 [shape = 'u32[144,128]{1,0:T(1,128)}', space=vmem, size = 0x12000, scoped, tag = 'internal scratch']
  %s0 = inlined_call_operand.vmem [shape: bf16[8,256], index: 0, kind: input, shape index: {}]
  %s1 = inlined_call_operand.vmem [shape: bf16[256,32], index: 1, kind: input, shape index: {}]
  %s2 = inlined_call_operand.vmem [shape: f32[1,32], index: 2, kind: input, shape index: {}]
  %s3 = inlined_call_operand.vmem [shape: f32[8,32], index: 3, kind: input, shape index: {}]
  %s4 = inlined_call_operand.hbm [shape: bf16[8,32], index: 4, kind: output, shape index: {}]
  %s5 = sld [smem:[#allocation0]]
  $region26: #{tpu_custom_call.1} parent=0
    _
  %s7 = ssub.s32 1, %s5
  %s8 = scalar_select 0, %s7, %s5
  $region1: #{tpu_custom_call.1} parent=0
    #allocation2 [shape = 'u8[2048]{0}', space=vmem, size = 0x800, scoped, tag = 'output window, operand 0, single buffered']
    #allocation3 [shape = 's32[1]{0}', space=sflag, size = 0x4, scoped, tag = 'scoped memory for tpu_custom_call.1']
    %9 = vsyncpa [#allocation3], 0
    // Predicated region
    $region2: #{tpu_custom_call.1} parent=1 // pred_check
      _
    $region3: #{tpu_custom_call.1} parent=1 // pred_check_branch
      %11 = sbr.rel (0) target = $region5
    $region4: #{tpu_custom_call.1} parent=1 // pred_region
      _
    $region5: #{tpu_custom_call.1} parent=1 // pred_fallthru
      _
    // Predicated region
    $region6: #{tpu_custom_call.1} parent=1 // pred_check
      _
    $region7: #{tpu_custom_call.1} parent=1 // pred_check_branch
      %13 = sbr.rel (0) target = $region9
    $region8: #{tpu_custom_call.1} parent=1 // pred_region
      _
    $region9: #{tpu_custom_call.1} parent=1 // pred_fallthru
      _
    // Predicated region
    $region10: #{tpu_custom_call.1} parent=1 // pred_check
      _
    $region11: #{tpu_custom_call.1} parent=1 // pred_check_branch
      %15 = sbr.rel (0) target = $region13
    $region12: #{tpu_custom_call.1} parent=1 // pred_region
      _
    $region13: #{tpu_custom_call.1} parent=1 // pred_fallthru
      _
    // Predicated region
    $region14: #{tpu_custom_call.1} parent=1 // pred_check
      _
    $region15: #{tpu_custom_call.1} parent=1 // pred_check_branch
      %17 = sbr.rel (0) target = $region17
    $region16: #{tpu_custom_call.1} parent=1 // pred_region
      _
    $region17: #{tpu_custom_call.1} parent=1 // pred_fallthru
      _
    %v19 = vld [vmem:[%s0] sm:$0xff]
    %v20 = vld [vmem:[%s1] sm:$0xf]
    %v21 = vld [vmem:[%s1 + $0x4] sm:$0xf]
    %v22 = vld [vmem:[%s1 + $0x8] sm:$0xf]
    %v23 = vld [vmem:[%s1 + $0xc] sm:$0xf]
    %v24 = vld [vmem:[%s1 + $0x10] sm:$0xf]
    %v25 = vld [vmem:[%s1 + $0x14] sm:$0xf]
    %v26 = vld [vmem:[%s1 + $0x18] sm:$0xf]
    %v27 = vld [vmem:[%s1 + $0x1c] sm:$0xf]
    %v28 = vld [vmem:[%s1 + $0x20] sm:$0xf]
    %v29 = vld [vmem:[%s1 + $0x24] sm:$0xf]
    %v30 = vld [vmem:[%s1 + $0x28] sm:$0xf]
    %v31 = vld [vmem:[%s1 + $0x2c] sm:$0xf]
    %v32 = vld [vmem:[%s1 + $0x30] sm:$0xf]
    %v33 = vld [vmem:[%s1 + $0x34] sm:$0xf]
    %v34 = vld [vmem:[%s1 + $0x38] sm:$0xf]
    %v35 = vld [vmem:[%s1 + $0x3c] sm:$0xf]
    %v36 = vld [vmem:[%s1 + $0x40] sm:$0xf]
    %v37 = vld [vmem:[%s1 + $0x44] sm:$0xf]
    %v38 = vld [vmem:[%s1 + $0x48] sm:$0xf]
    %v39 = vld [vmem:[%s1 + $0x4c] sm:$0xf]
    %v40 = vld [vmem:[%s1 + $0x50] sm:$0xf]
    %v41 = vld [vmem:[%s1 + $0x54] sm:$0xf]
    %v42 = vld [vmem:[%s1 + $0x58] sm:$0xf]
    %v43 = vld [vmem:[%s1 + $0x5c] sm:$0xf]
    %v44 = vld [vmem:[%s1 + $0x60] sm:$0xf]
    %v45 = vld [vmem:[%s1 + $0x64] sm:$0xf]
    %v46 = vld [vmem:[%s1 + $0x68] sm:$0xf]
    %v47 = vld [vmem:[%s1 + $0x6c] sm:$0xf]
    %v48 = vld [vmem:[%s1 + $0x70] sm:$0xf]
    %v49 = vld [vmem:[%s1 + $0x74] sm:$0xf]
    %v50 = vld [vmem:[%s1 + $0x78] sm:$0xf]
    %v51 = vld [vmem:[%s1 + $0x7c] sm:$0xf]
    %v52 = vld [vmem:[%s2] sm:$0x1]
    %v54 = vlaneseq
    %v55 = vshrl.u32 %v54, 7
    %v56 = vsub.s32 0, %v55
    %v57 = vrot.slane %v52, %v56
    %v60 = vunpack.c.l.b16 %v19
    %v61 = vunpack.c.h.b16 %v19
    %v62 = vpack.c.b16 %v60, %v60
    %v63 = vpack.c.b16 %v61, %v61
    %v98 = vunpack.c.l.b16 %v20
    %v99 = vunpack.c.l.b16 %v21
    %v100 = vunpack.c.l.b16 %v22
    %v101 = vunpack.c.l.b16 %v23
    %v102 = vunpack.c.l.b16 %v24
    %v103 = vunpack.c.l.b16 %v25
    %v104 = vunpack.c.l.b16 %v26
    %v105 = vunpack.c.l.b16 %v27
    %v106 = vunpack.c.l.b16 %v28
    %v107 = vunpack.c.l.b16 %v29
    %v108 = vunpack.c.l.b16 %v30
    %v109 = vunpack.c.l.b16 %v31
    %v110 = vunpack.c.l.b16 %v32
    %v111 = vunpack.c.l.b16 %v33
    %v112 = vunpack.c.l.b16 %v34
    %v113 = vunpack.c.l.b16 %v35
    %v114 = vunpack.c.l.b16 %v36
    %v115 = vunpack.c.l.b16 %v37
    %v116 = vunpack.c.l.b16 %v38
    %v117 = vunpack.c.l.b16 %v39
    %v118 = vunpack.c.l.b16 %v40
    %v119 = vunpack.c.l.b16 %v41
    %v120 = vunpack.c.l.b16 %v42
    %v121 = vunpack.c.l.b16 %v43
    %v122 = vunpack.c.l.b16 %v44
    %v123 = vunpack.c.l.b16 %v45
    %v124 = vunpack.c.l.b16 %v46
    %v125 = vunpack.c.l.b16 %v47
    %v126 = vunpack.c.l.b16 %v48
    %v127 = vunpack.c.l.b16 %v49
    %v128 = vunpack.c.l.b16 %v50
    %v129 = vunpack.c.l.b16 %v51
    %v130 = vpack.c.b16 %v99, %v98
    %v131 = vpack.c.b16 %v101, %v100
    %v132 = vpack.c.b16 %v103, %v102
    %v133 = vpack.c.b16 %v105, %v104
    %v134 = vpack.c.b16 %v107, %v106
    %v135 = vpack.c.b16 %v109, %v108
    %v136 = vpack.c.b16 %v111, %v110
    %v137 = vpack.c.b16 %v113, %v112
    %v138 = vpack.c.b16 %v115, %v114
    %v139 = vpack.c.b16 %v117, %v116
    %v140 = vpack.c.b16 %v119, %v118
    %v141 = vpack.c.b16 %v121, %v120
    %v142 = vpack.c.b16 %v123, %v122
    %v143 = vpack.c.b16 %v125, %v124
    %v144 = vpack.c.b16 %v127, %v126
    %v145 = vpack.c.b16 %v129, %v128
    %162 = vmatprep.subr.bf16.mxu0 0
    %163 = vmatpush1.bf16.msra.mxu0 %v137
    %164 = vmatprep.subr.bf16.mxu0 0
    %165 = vmatpush1.bf16.msra.mxu0 %v136
    %166 = vmatprep.subr.bf16.mxu0 0
    %167 = vmatpush1.bf16.msra.mxu0 %v135
    %168 = vmatprep.subr.bf16.mxu0 0
    %169 = vmatpush1.bf16.msra.mxu0 %v134
    %170 = vmatprep.subr.bf16.mxu0 0
    %171 = vmatpush1.bf16.msra.mxu0 %v133
    %172 = vmatprep.subr.bf16.mxu0 0
    %173 = vmatpush1.bf16.msra.mxu0 %v132
    %174 = vmatprep.subr.bf16.mxu0 0
    %175 = vmatpush1.bf16.msra.mxu0 %v131
    %176 = vmatprep.subr.bf16.mxu0 0
    %177 = vmatpush1.bf16.msra.mxu0 %v130
    %178 = vmatprep.subr.bf16.mxu0 0
    %179 = vmatpush2.bf16.msra.mxu0 %v145
    %180 = vmatprep.subr.bf16.mxu0 0
    %181 = vmatpush2.bf16.msra.mxu0 %v144
    %182 = vmatprep.subr.bf16.mxu0 0
    %183 = vmatpush2.bf16.msra.mxu0 %v143
    %184 = vmatprep.subr.bf16.mxu0 0
    %185 = vmatpush2.bf16.msra.mxu0 %v142
    %186 = vmatprep.subr.bf16.mxu0 0
    %187 = vmatpush2.bf16.msra.mxu0 %v141
    %188 = vmatprep.subr.bf16.mxu0 0
    %189 = vmatpush2.bf16.msra.mxu0 %v140
    %190 = vmatprep.subr.bf16.mxu0 0
    %191 = vmatpush2.bf16.msra.mxu0 %v139
    %192 = vmatprep.subr.bf16.mxu0 0
    %193 = vmatpush2.bf16.msra.mxu0 %v138
    %194 = vmatprep.mubr.bf16.mxu0 %v63
    %195 = vmatmul.mubr.bf16.gmra.mxu0 %v62
    %v196 = vpop.f32.mrf.mxu0
    %v197 = vadd.f32 %v57, %v196
    %v198 = vpop.f32.mrf.mxu0
    %v199 = vpop.f32.mrf.mxu0
    %v200 = vpop.f32.mrf.mxu0
    %201 = vdwg.mxu0
    %v202 = vld [vmem:[%s3] sm:$0xff]
    %v203 = vadd.f32 %v197, %v202
    %v204 = vpack.c.bf16 %v203, %v203
    %vm205 = vcmask 257024
    %206 = vst.msk [vmem:[#allocation2] sm:$0xf] %vm205, %v204
    // Predicated region
    $region18: #{tpu_custom_call.1} parent=1 // pred_check
      _
    $region19: #{tpu_custom_call.1} parent=1 // pred_check_branch
      %208 = sbr.rel (0) target = $region21
    $region20: #{tpu_custom_call.1} parent=1 // pred_region
      %s210 = ssub.s32 64, 64
      %211 = vsyncadd [#allocation3], %s210
      %s213 = sshll.u32 [#allocation2], 4
      %s214 = int_to_ptr.vmem [resolvable:$true] %s213
      %216 = dma.vmem_to_hbm [thread:$0]  %s214, 64, %s4, [#allocation3]
    $region21: #{tpu_custom_call.1} parent=1 // pred_fallthru
      _
    // Predicated region
    $region22: #{tpu_custom_call.1} parent=1 // pred_check
      _
    $region23: #{tpu_custom_call.1} parent=1 // pred_check_branch
      %218 = sbr.rel (0) target = $region25
    $region24: #{tpu_custom_call.1} parent=1 // pred_region
      %219 = dma.done [#allocation3], 64
    $region25: #{tpu_custom_call.1} parent=1 // pred_fallthru
      _
    %220 = vsyncpa [#allocation3], 1

</llo_original>
